<compile_context>
chip_gen: v7x
topology: tpu7x:2x2x1
jax: 0.10.0
libtpu: 0.0.40
codegen_flags: <defaults>
</compile_context>

<pallas_src>
import math

import jax
import jax.numpy as jnp
from jax.experimental import pallas as pl
from jax.experimental.pallas import tpu as pltpu


def _spatial_dropout_kernel(x_ref, noise_ref, o_ref):
    # x_ref: (bB, tT, D2); noise_ref: (bB, 1, D2), same dtype, pre-scaled by
    # 1/keep_prob.  Native-dtype multiply (matches PyTorch semantics).
    o_ref[...] = x_ref[...] * noise_ref[...]


def _vmem_capacity_bytes():
    try:
        return int(pltpu.get_tpu_info().vmem_capacity_bytes)
    except Exception:
        return 64 << 20  # v7x per-TC physical VMEM (smallest current generation)


def _block_budget_bytes():
    """~8 MiB per input block, capped so double-buffered in+out+noise fits VMEM."""
    pipeline_cap = min(48 << 20, (_vmem_capacity_bytes() * 3) // 4)
    return max(1 << 20, min(8 << 20, pipeline_cap // 4))


def _choose_tiles(B, T2, D2, itemsize, block_budget):
    """Pick (batch_tile bB, T_tile tT) for the (B, T2, D2) streaming multiply."""
    sub = max(8, 32 // itemsize)          # dtype-specific sublane multiple (8/16/32)
    row_bytes = T2 * D2 * itemsize        # one full (T2, D2) slab
    total_bytes = B * row_bytes

    if row_bytes > block_budget:
        # One batch row per step, tile along T (plenty of grid steps).
        rows = (block_budget // max(D2 * itemsize, 1)) // sub * sub
        tT = int(min(max(rows, sub), T2))
        if tT < T2 and tT % 8 != 0:       # keep the (8, 128) block constraint
            tT = T2
        return 1, tT

    # Whole rows fit in one block: fold batch rows per step to amortize the
    # ~0.35 us per-grid-step overhead and issue large DMAs.
    bB = int(min(B, max(1, block_budget // max(row_bytes, 1))))
    tT = T2

    # For sizeable arrays keep >= 4 grid steps so input DMA / compute /
    # writeback overlap and both v7x TensorCores get sharded work.
    if total_bytes > (2 << 20):
        target = 4
        b_steps = -(-B // bB)
        if b_steps < target:
            bB = max(1, -(-B // min(B, target)))
            b_steps = -(-B // bB)
        if b_steps < target and T2 > sub:
            t_steps = -(-target // b_steps)
            tT = int(min(T2, max(sub, ((T2 // t_steps) // sub) * sub)))
    return bB, tT


def spatial_dropout(x, key, drop_prob, training=True):
    """Pallas implementation of MFCFNet Spatial_Dropout.forward.

    Accepts (B, ..., D); the PyTorch noise shape (B, 1, ..., 1, D) broadcasts
    over all middle axes, so they are flattened into a single T axis.
    """
    if (not training) or drop_prob == 0.0:
        return x
    if drop_prob >= 1.0:
        return jnp.zeros_like(x)

    orig_shape = x.shape
    B, D = orig_shape[0], orig_shape[-1]
    T = 1
    for s in orig_shape[1:-1]:
        T *= int(s)
    x3 = x.reshape(B, T, D)

    keep_prob = 1.0 - float(drop_prob)
    keep = jax.random.bernoulli(key, p=keep_prob, shape=(B, D))
    # Pre-scaled inverted-dropout mask in the input dtype (as PyTorch does).
    noise = (keep.astype(jnp.float32) * jnp.float32(1.0 / keep_prob)).astype(x.dtype)

    # Lane-dense folding: fold k consecutive T rows into the lane dim so the
    # last dim becomes a multiple of 128 (full-lane stores).  Exact because the
    # mask is constant along T.
    k = 1
    if D % 128 != 0:
        k = 128 // math.gcd(D, 128)
        while k > 1 and T % k != 0:
            k //= 2
    T2, D2 = T // k, D * k
    x2 = x3.reshape(B, T2, D2)
    noise2 = (jnp.tile(noise, (1, k)) if k > 1 else noise).reshape(B, 1, D2)

    itemsize = jnp.dtype(x.dtype).itemsize
    budget = _block_budget_bytes()
    bB, tT = _choose_tiles(B, T2, D2, itemsize, budget)
    grid = (pl.cdiv(B, bB), pl.cdiv(T2, tT))

    # Explicit VMEM limit from the actual double-buffered footprint.
    in_block = bB * tT * D2 * itemsize
    noise_block = bB * D2 * itemsize
    pipeline_bytes = 2 * (2 * in_block + noise_block)
    vmem_limit = int(min(_vmem_capacity_bytes(),
                         max(pipeline_bytes + (4 << 20), 16 << 20)))

    cost = pl.CostEstimate(
        flops=B * T * D,
        transcendentals=0,
        bytes_accessed=2 * B * T * D * itemsize + B * D2 * itemsize,
    )

    out = pl.pallas_call(
        _spatial_dropout_kernel,
        out_shape=jax.ShapeDtypeStruct((B, T2, D2), x.dtype),
        grid_spec=pltpu.PrefetchScalarGridSpec(
            num_scalar_prefetch=0,
            grid=grid,
            in_specs=[
                pl.BlockSpec((bB, tT, D2), lambda bi, ti: (bi, ti, 0)),
                pl.BlockSpec((bB, 1, D2), lambda bi, ti: (bi, 0, 0)),
            ],
            out_specs=pl.BlockSpec((bB, tT, D2), lambda bi, ti: (bi, ti, 0)),
        ),
        compiler_params=pltpu.CompilerParams(
            dimension_semantics=("parallel", "parallel"),
            vmem_limit_bytes=vmem_limit,
        ),
        cost_estimate=cost,
    )(x2, noise2)

    return out.reshape(orig_shape)


if __name__ == "__main__":
    key = jax.random.PRNGKey(0)
    kx, kmask, kx2, kmask2 = jax.random.split(key, 4)

    # --- Test 1: f32, D a divisor of 128 (folds to lane width exactly). ---
    B, T, D = 2, 8, 32
    x = jax.random.normal(kx, (B, T, D), dtype=jnp.float32)
    drop_prob = 0.5
    out = jax.block_until_ready(spatial_dropout(x, kmask, drop_prob, training=True))

    assert out.shape == x.shape and out.dtype == x.dtype
    scaled = x / (1.0 - drop_prob)
    is_zero = jnp.isclose(out, 0.0, atol=1e-6)
    is_scaled = jnp.isclose(out, scaled, rtol=1e-5, atol=1e-6)
    assert bool(jnp.all(is_zero | is_scaled))
    # Mask constant along T: each (batch, feature) column fully dropped or kept.
    col_zero = jnp.all(is_zero, axis=1)
    col_scaled = jnp.all(is_scaled, axis=1)
    assert bool(jnp.all(col_zero | col_scaled))

    # Eval mode / p == 0 -> identity; p == 1 -> zeros.
    out_eval = jax.block_until_ready(spatial_dropout(x, kmask, drop_prob, training=False))
    assert bool(jnp.all(out_eval == x))
    out_p1 = jax.block_until_ready(spatial_dropout(x, kmask, 1.0, training=True))
    assert bool(jnp.all(out_p1 == 0))

    # --- Test 2: bf16, non-divisor D=48 (exercises generalized lane folding). ---
    B2, T2_, D2_ = 2, 16, 48
    xb = jax.random.normal(kx2, (B2, T2_, D2_), dtype=jnp.bfloat16)
    p2 = 0.3
    outb = jax.block_until_ready(spatial_dropout(xb, kmask2, p2, training=True))
    assert outb.shape == xb.shape and outb.dtype == xb.dtype

    outb_f = outb.astype(jnp.float32)
    xb_f = xb.astype(jnp.float32)
    zero_b = outb_f == 0.0
    # Nonzero entries ~= x / (1 - p) up to bf16 rounding.
    ref_b = xb_f * float(jnp.bfloat16(1.0 / (1.0 - p2)))
    close_b = jnp.isclose(outb_f, ref_b, rtol=2e-2, atol=1e-3)
    assert bool(jnp.all(zero_b | close_b))
    # Columns are constant along T (fully dropped or fully kept).
    colz = jnp.all(zero_b, axis=1)
    colk = jnp.all(~zero_b, axis=1)
    assert bool(jnp.all(colz | colk))

    print("KERNEL_OK")
</pallas_src>

<mosaic_0001>
module attributes {stable_mosaic.version = 11 : i64} {
  func.func @_spatial_dropout_kernel(%arg0: i32, %arg1: i32, %arg2: memref<2x2x128xf32, #tpu.memory_space<vmem>>, %arg3: memref<2x1x128xf32, #tpu.memory_space<vmem>>, %arg4: memref<2x2x128xf32, #tpu.memory_space<vmem>>) attributes {dimension_semantics = [#tpu.dimension_semantics<parallel>, #tpu.dimension_semantics<parallel>], iteration_bounds = array<i64: 1, 1>, scalar_prefetch = 0 : i64, scratch_operands = 0 : i64, tpu.core_type = #tpu.core_type<tc>, window_params = [{transform_indices = @transform_0, window_bounds = array<i64: 2, 2, 128>}, {transform_indices = @transform_1, window_bounds = array<i64: 2, 1, 128>}, {transform_indices = @transform_2, window_bounds = array<i64: 2, 2, 128>}]} {
    %c0 = arith.constant 0 : index
    %c0_0 = arith.constant 0 : index
    %c0_1 = arith.constant 0 : index
    %0 = vector.load %arg2[%c0, %c0_0, %c0_1] : memref<2x2x128xf32, #tpu.memory_space<vmem>>, vector<2x2x128xf32>
    %c0_2 = arith.constant 0 : index
    %c0_3 = arith.constant 0 : index
    %c0_4 = arith.constant 0 : index
    %1 = vector.load %arg3[%c0_2, %c0_3, %c0_4] : memref<2x1x128xf32, #tpu.memory_space<vmem>>, vector<2x1x128xf32>
    %2 = vector.broadcast %1 : vector<2x1x128xf32> to vector<2x2x128xf32>
    %3 = arith.mulf %0, %2 : vector<2x2x128xf32>
    %c0_5 = arith.constant 0 : index
    %c0_6 = arith.constant 0 : index
    %c0_7 = arith.constant 0 : index
    %4 = vector.load %arg4[%c0_5, %c0_6, %c0_7] : memref<2x2x128xf32, #tpu.memory_space<vmem>>, vector<2x2x128xf32>
    tpu.vector_store %arg4[%c0_5, %c0_6, %c0_7], %3 {strides = array<i32>} : memref<2x2x128xf32, #tpu.memory_space<vmem>>, vector<2x2x128xf32>,
    return
  }
  func.func @transform_0(%arg0: i32, %arg1: i32) -> (i32, i32, i32) {
    %c0_i32 = arith.constant 0 : i32
    %c0_i32_0 = arith.constant 0 : i32
    return %arg0, %arg1, %c0_i32 : i32, i32, i32
  }
  func.func @transform_1(%arg0: i32, %arg1: i32) -> (i32, i32, i32) {
    %c0_i32 = arith.constant 0 : i32
    %c0_i32_0 = arith.constant 0 : i32
    %c0_i32_1 = arith.constant 0 : i32
    return %arg0, %c0_i32, %c0_i32_0 : i32, i32, i32
  }
  func.func @transform_2(%arg0: i32, %arg1: i32) -> (i32, i32, i32) {
    %c0_i32 = arith.constant 0 : i32
    %c0_i32_0 = arith.constant 0 : i32
    return %arg0, %arg1, %c0_i32 : i32, i32, i32
  }
}

</mosaic_0001>

<llo_original>
// kernel: tpu_custom_call.1
$region0: #{tpu_custom_call.1}
  #allocation0 [shape = 'u32[]', space=smem, size = 0x4, offset = 0x4, fixed_abs, tag = 'smem constant byte address 0x4 - core index']
  #allocation1 [shape = 'u32[144,128]{1,0:T(1,128)}', space=vmem, size = 0x12000, scoped, tag = 'internal scratch']
  %s0 = inlined_call_operand.hbm [shape: f32[2,2,128], index: 0, kind: input, shape index: {}]
  %s1 = inlined_call_operand.vmem [shape: f32[2,1,128], index: 1, kind: input, shape index: {}]
  %s2 = inlined_call_operand.hbm [shape: f32[2,2,128], index: 2, kind: output, shape index: {}]
  %s3 = sld [smem:[#allocation0]]
  $region22: #{tpu_custom_call.1} parent=0
    _
  %s5 = ssub.s32 1, %s3
  %s6 = scalar_select 0, %s5, %s3
  $region1: #{tpu_custom_call.1} parent=0
    #allocation2 [shape = 'u8[2048]{0}', space=vmem, size = 0x800, scoped, tag = 'input window, operand 0, single buffered']
    #allocation3 [shape = 's32[1]{0}', space=sflag, size = 0x4, scoped, tag = 'scoped memory for tpu_custom_call.1']
    #allocation4 [shape = 's32[1]{0}', space=sflag, size = 0x4, scoped, tag = 'scoped memory for tpu_custom_call.1']
    #allocation5 [shape = 'u8[2048]{0}', space=vmem, size = 0x800, scoped, tag = 'output window, operand 0, single buffered']
    %7 = vsyncpa [#allocation3], 0
    %8 = vsyncpa [#allocation4], 0
    // Predicated region
    $region2: #{tpu_custom_call.1} parent=1 // pred_check
      _
    $region3: #{tpu_custom_call.1} parent=1 // pred_check_branch
      %10 = sbr.rel (0) target = $region5
    $region4: #{tpu_custom_call.1} parent=1 // pred_region
      %s12 = ssub.s32 64, 64
      %13 = vsyncadd [#allocation3], %s12
      %s14 = sshll.u32 [#allocation2], 4
      %s15 = int_to_ptr.vmem [resolvable:$true] %s14
      %20 = dma.hbm_to_vmem [thread:$0]  %s0, 64, %s15, [#allocation3], 32, 32, 2
    $region5: #{tpu_custom_call.1} parent=1 // pred_fallthru
      _
    // Predicated region
    $region6: #{tpu_custom_call.1} parent=1 // pred_check
      _
    $region7: #{tpu_custom_call.1} parent=1 // pred_check_branch
      %22 = sbr.rel (0) target = $region9
    $region8: #{tpu_custom_call.1} parent=1 // pred_region
      _
    $region9: #{tpu_custom_call.1} parent=1 // pred_fallthru
      _
    // Predicated region
    $region10: #{tpu_custom_call.1} parent=1 // pred_check
      _
    $region11: #{tpu_custom_call.1} parent=1 // pred_check_branch
      %24 = sbr.rel (0) target = $region13
    $region12: #{tpu_custom_call.1} parent=1 // pred_region
      %25 = dma.done [#allocation3], 64
    $region13: #{tpu_custom_call.1} parent=1 // pred_fallthru
      _
    %v26 = vld [vmem:[#allocation2] sm:$0x3]
    %v27 = vld [vmem:[#allocation2 + $0x2] sm:$0x3]
    %v28 = vld [vmem:[%s1] sm:$0x1]
    %v29 = vld [vmem:[%s1 + $0x1] sm:$0x1]
    %v32 = vlaneseq
    %v33 = vshrl.u32 %v32, 7
    %v34 = vsub.s32 0, %v33
    %v35 = vrot.slane %v28, %v34
    %v36 = vlaneseq
    %v37 = vshrl.u32 %v36, 7
    %v38 = vsub.s32 0, %v37
    %v39 = vrot.slane %v29, %v38
    %v42 = vmul.f32 %v26, %v35
    %v43 = vmul.f32 %v27, %v39
    %44 = vst [vmem:[#allocation5] sm:$0x3] %v42
    %45 = vst [vmem:[#allocation5 + $0x2] sm:$0x3] %v43
    // Predicated region
    $region14: #{tpu_custom_call.1} parent=1 // pred_check
      _
    $region15: #{tpu_custom_call.1} parent=1 // pred_check_branch
      %47 = sbr.rel (0) target = $region17
    $region16: #{tpu_custom_call.1} parent=1 // pred_region
      %s49 = ssub.s32 64, 64
      %50 = vsyncadd [#allocation4], %s49
      %s51 = sshll.u32 [#allocation5], 4
      %s52 = int_to_ptr.vmem [resolvable:$true] %s51
      %57 = dma.vmem_to_hbm [thread:$0]  %s52, 64, %s2, [#allocation4], 32, 32, 2
    $region17: #{tpu_custom_call.1} parent=1 // pred_fallthru
      _
    // Predicated region
    $region18: #{tpu_custom_call.1} parent=1 // pred_check
      _
    $region19: #{tpu_custom_call.1} parent=1 // pred_check_branch
      %59 = sbr.rel (0) target = $region21
    $region20: #{tpu_custom_call.1} parent=1 // pred_region
      %60 = dma.done [#allocation4], 64
    $region21: #{tpu_custom_call.1} parent=1 // pred_fallthru
      _
    %61 = vsyncpa [#allocation3], 1
    %62 = vsyncpa [#allocation4], 1

</llo_original>
